<compile_context>
chip_gen: v7x
topology: tpu7x:2x2x1
jax: 0.10.0
libtpu: 0.0.40
codegen_flags: <defaults>
</compile_context>

<pallas_src>
import numpy as np
import jax
import jax.numpy as jnp
from jax.experimental import pallas as pl
from jax.experimental.pallas import tpu as pltpu


# ---------------------------------------------------------------------------
# Fused Pallas kernel: x -> conv1 -> conv2 -> conv3 -> pool+fc
# ---------------------------------------------------------------------------
def fused_cnn_kernel(x_ref, m1_ref, b1_ref, m2_ref, b2_ref, m3_ref, b3_ref,
                     wh_ref, bh_ref, o_ref):
    """All operands are whole-array VMEM refs.

    x:(N, H*W*Cin)  m_l:(S_in*C_in, S_out*C_out)  b_l:(1, S_out*C_out)
    wh:(S3*C3, num_classes)  bh:(1, num_classes)  o:(N, num_classes)
    """
    a = x_ref[...]
    for m_ref, b_ref in ((m1_ref, b1_ref), (m2_ref, b2_ref), (m3_ref, b3_ref)):
        a = jnp.dot(a, m_ref[...], preferred_element_type=jnp.float32) + b_ref[...]
        a = jnp.maximum(a, 0.0)            # ReLU; Dropout = identity (eval mode)
    out = jnp.dot(a, wh_ref[...], preferred_element_type=jnp.float32) + bh_ref[...]
    o_ref[...] = out.astype(o_ref.dtype)


# ---------------------------------------------------------------------------
# One-time host-side weight lowering (numpy, concrete weights only)
# ---------------------------------------------------------------------------
def _fold_conv_layer(w, b, hin, win, stride=2):
    """Lower a stride-`stride` VALID conv into a dense matmul matrix.

    M[p*Cin + ci, o*Cout + co] = w[co, ci, kh, kw]  where
      p = (stride*oh + kh)*Win + (stride*ow + kw),  o = oh*OW + ow.
    """
    w = np.asarray(jax.device_get(w), dtype=np.float32)
    b = np.asarray(jax.device_get(b), dtype=np.float32)
    cout, cin, kh_sz, kw_sz = w.shape
    oh_sz = (hin - kh_sz) // stride + 1
    ow_sz = (win - kw_sz) // stride + 1
    m = np.zeros((hin * win * cin, oh_sz * ow_sz * cout), dtype=np.float32)
    for oh in range(oh_sz):
        for ow in range(ow_sz):
            o = oh * ow_sz + ow
            for kh in range(kh_sz):
                for kw in range(kw_sz):
                    p = (stride * oh + kh) * win + (stride * ow + kw)
                    m[p * cin:(p + 1) * cin, o * cout:(o + 1) * cout] = w[:, :, kh, kw].T
    bias = np.tile(b, oh_sz * ow_sz)[None, :]            # (1, S_out*Cout)
    return jnp.asarray(m), jnp.asarray(bias), oh_sz, ow_sz


def prepare_pruned_cnn(params, input_hw):
    """Fold conv weights into Toeplitz matrices and fold pool into the FC."""
    h, w = input_hw
    folded = []
    for (cw, cb) in params["convs"]:
        m, brow, h, w = _fold_conv_layer(cw, cb, h, w, stride=2)
        folded.extend([m, brow])
    fc_w, fc_b = params["fc"]
    fc_w = np.asarray(jax.device_get(fc_w), dtype=np.float32)   # (NC, C)
    fc_b = np.asarray(jax.device_get(fc_b), dtype=np.float32)
    s_out = h * w                                               # final spatial size
    # mean over spatial folded into the head matmul: rows (o, co) -> fc_w[:, co]/S
    w_head = np.tile(fc_w.T, (s_out, 1)) / float(s_out)         # (S*C, NC)
    folded.extend([jnp.asarray(w_head), jnp.asarray(fc_b)[None, :]])
    return tuple(folded)


# ---------------------------------------------------------------------------
# Forward wrapper: single pallas_call, whole arrays resident in VMEM
# ---------------------------------------------------------------------------
def pruned_cnn_forward(x, folded):
    """x: (N, Cin, H, W) float32.  Returns logits (N, num_classes)."""
    n = x.shape[0]
    # NHWC (spatial-major, channel-minor) flatten; Cin == 1 so this is just a
    # reshape and XLA folds the transpose away.
    x_flat = jnp.transpose(x, (0, 2, 3, 1)).reshape(n, -1)

    m1, b1, m2, b2, m3, b3, wh, bh = folded
    num_classes = wh.shape[1]

    flops = 2 * n * (m1.shape[0] * m1.shape[1] + m2.shape[0] * m2.shape[1]
                     + m3.shape[0] * m3.shape[1] + wh.shape[0] * wh.shape[1])
    bytes_accessed = (sum(int(a.size) for a in (x_flat, m1, b1, m2, b2, m3, b3, wh, bh))
                      + n * num_classes) * 4

    vmem_spec = pl.BlockSpec(memory_space=pltpu.MemorySpace.VMEM)
    return pl.pallas_call(
        fused_cnn_kernel,
        out_shape=jax.ShapeDtypeStruct((n, num_classes), jnp.float32),
        in_specs=[vmem_spec] * 9,
        out_specs=vmem_spec,
        cost_estimate=pl.CostEstimate(flops=flops, transcendentals=0,
                                      bytes_accessed=bytes_accessed),
    )(x_flat, m1, b1, m2, b2, m3, b3, wh, bh)


# ---------------------------------------------------------------------------
# Deterministic parameter init (shapes from PrunedCNN.__init__)
# ---------------------------------------------------------------------------
def init_params(key, num_classes=10):
    ks = jax.random.split(key, 8)
    convs = []
    cin = 1
    for i in range(3):
        w = 0.1 * jax.random.normal(ks[2 * i], (16, cin, 3, 3), dtype=jnp.float32)
        b = 0.1 * jax.random.normal(ks[2 * i + 1], (16,), dtype=jnp.float32)
        convs.append((w, b))
        cin = 16
    fc_w = 0.1 * jax.random.normal(ks[6], (num_classes, 16), dtype=jnp.float32)
    fc_b = 0.1 * jax.random.normal(ks[7], (num_classes,), dtype=jnp.float32)
    return {"convs": convs, "fc": (fc_w, fc_b)}


# ---------------------------------------------------------------------------
# Pure-JAX reference (mirrors PyTorch forward in eval mode)
# ---------------------------------------------------------------------------
def reference_forward(x, params):
    h = x
    for (w, b) in params["convs"]:
        h = jax.lax.conv_general_dilated(
            h, w, window_strides=(2, 2), padding="VALID",
            dimension_numbers=("NCHW", "OIHW", "NCHW"),
            precision=jax.lax.Precision.HIGHEST)
        h = jax.nn.relu(h + b.reshape(1, -1, 1, 1))
    h = h.mean(axis=(2, 3))
    fc_w, fc_b = params["fc"]
    return h @ fc_w.T + fc_b


if __name__ == "__main__":
    key = jax.random.PRNGKey(0)
    k_x, k_p = jax.random.split(key)

    # batch=2, in_channels=1 (required by Conv2d(in_channels=1)), spatial=16
    x = jax.random.normal(k_x, (2, 1, 16, 16), dtype=jnp.float32)
    params = init_params(k_p, num_classes=10)

    # One-time weight lowering (host), then single fused Pallas kernel call.
    folded = prepare_pruned_cnn(params, input_hw=(16, 16))
    fwd = jax.jit(pruned_cnn_forward)
    # TODO(synk): training-mode dropout RNG masking not implemented (eval only).
    out = jax.block_until_ready(fwd(x, folded))

    ref = jax.block_until_ready(reference_forward(x, params))
    assert out.shape == (2, 10), out.shape
    assert jnp.allclose(out, ref, rtol=1e-3, atol=1e-3), (out, ref)

    print("KERNEL_OK")
</pallas_src>

<mosaic_0001>
module attributes {stable_mosaic.version = 11 : i64} {
  func.func @fused_cnn_kernel(%arg0: memref<2x256xf32, #tpu.memory_space<vmem>>, %arg1: memref<256x784xf32, #tpu.memory_space<vmem>>, %arg2: memref<1x784xf32, #tpu.memory_space<vmem>>, %arg3: memref<784x144xf32, #tpu.memory_space<vmem>>, %arg4: memref<1x144xf32, #tpu.memory_space<vmem>>, %arg5: memref<144x16xf32, #tpu.memory_space<vmem>>, %arg6: memref<1x16xf32, #tpu.memory_space<vmem>>, %arg7: memref<16x10xf32, #tpu.memory_space<vmem>>, %arg8: memref<1x10xf32, #tpu.memory_space<vmem>>, %arg9: memref<2x10xf32, #tpu.memory_space<vmem>>) attributes {dimension_semantics = [], scalar_prefetch = 0 : i64, scratch_operands = 0 : i64, tpu.core_type = #tpu.core_type<tc>} {
    %c0 = arith.constant 0 : index
    %c0_0 = arith.constant 0 : index
    %0 = vector.load %arg0[%c0, %c0_0] : memref<2x256xf32, #tpu.memory_space<vmem>>, vector<2x256xf32>
    %c0_1 = arith.constant 0 : index
    %c0_2 = arith.constant 0 : index
    %1 = vector.load %arg1[%c0_1, %c0_2] : memref<256x784xf32, #tpu.memory_space<vmem>>, vector<256x784xf32>
    %cst = arith.constant dense<0.000000e+00> : vector<2x784xf32>
    %2 = tpu.matmul %0, %1, %cst {dimension_numbers = #tpu.dot_dimension_numbers<[1], [0], [0], [1], [0, 0, 1, 1], [], []>} : vector<2x256xf32>, vector<256x784xf32>, vector<2x784xf32> -> vector<2x784xf32>
    %c0_3 = arith.constant 0 : index
    %c0_4 = arith.constant 0 : index
    %3 = vector.load %arg2[%c0_3, %c0_4] : memref<1x784xf32, #tpu.memory_space<vmem>>, vector<1x784xf32>
    %4 = vector.broadcast %3 : vector<1x784xf32> to vector<2x784xf32>
    %5 = arith.addf %2, %4 : vector<2x784xf32>
    %cst_5 = arith.constant 0.000000e+00 : f32
    %6 = vector.broadcast %cst_5 : f32 to vector<2x784xf32>
    %7 = arith.maximumf %5, %6 : vector<2x784xf32>
    %c0_6 = arith.constant 0 : index
    %c0_7 = arith.constant 0 : index
    %8 = vector.load %arg3[%c0_6, %c0_7] : memref<784x144xf32, #tpu.memory_space<vmem>>, vector<784x144xf32>
    %cst_8 = arith.constant dense<0.000000e+00> : vector<2x144xf32>
    %9 = tpu.matmul %7, %8, %cst_8 {dimension_numbers = #tpu.dot_dimension_numbers<[1], [0], [0], [1], [0, 0, 1, 1], [], []>} : vector<2x784xf32>, vector<784x144xf32>, vector<2x144xf32> -> vector<2x144xf32>
    %c0_9 = arith.constant 0 : index
    %c0_10 = arith.constant 0 : index
    %10 = vector.load %arg4[%c0_9, %c0_10] : memref<1x144xf32, #tpu.memory_space<vmem>>, vector<1x144xf32>
    %11 = vector.broadcast %10 : vector<1x144xf32> to vector<2x144xf32>
    %12 = arith.addf %9, %11 : vector<2x144xf32>
    %cst_11 = arith.constant 0.000000e+00 : f32
    %13 = vector.broadcast %cst_11 : f32 to vector<2x144xf32>
    %14 = arith.maximumf %12, %13 : vector<2x144xf32>
    %c0_12 = arith.constant 0 : index
    %c0_13 = arith.constant 0 : index
    %15 = vector.load %arg5[%c0_12, %c0_13] : memref<144x16xf32, #tpu.memory_space<vmem>>, vector<144x16xf32>
    %cst_14 = arith.constant dense<0.000000e+00> : vector<2x16xf32>
    %16 = tpu.matmul %14, %15, %cst_14 {dimension_numbers = #tpu.dot_dimension_numbers<[1], [0], [0], [1], [0, 0, 1, 1], [], []>} : vector<2x144xf32>, vector<144x16xf32>, vector<2x16xf32> -> vector<2x16xf32>
    %c0_15 = arith.constant 0 : index
    %c0_16 = arith.constant 0 : index
    %17 = vector.load %arg6[%c0_15, %c0_16] : memref<1x16xf32, #tpu.memory_space<vmem>>, vector<1x16xf32>
    %18 = vector.broadcast %17 : vector<1x16xf32> to vector<2x16xf32>
    %19 = arith.addf %16, %18 : vector<2x16xf32>
    %cst_17 = arith.constant 0.000000e+00 : f32
    %20 = vector.broadcast %cst_17 : f32 to vector<2x16xf32>
    %21 = arith.maximumf %19, %20 : vector<2x16xf32>
    %c0_18 = arith.constant 0 : index
    %c0_19 = arith.constant 0 : index
    %22 = vector.load %arg7[%c0_18, %c0_19] : memref<16x10xf32, #tpu.memory_space<vmem>>, vector<16x10xf32>
    %cst_20 = arith.constant dense<0.000000e+00> : vector<2x10xf32>
    %23 = tpu.matmul %21, %22, %cst_20 {dimension_numbers = #tpu.dot_dimension_numbers<[1], [0], [0], [1], [0, 0, 1, 1], [], []>} : vector<2x16xf32>, vector<16x10xf32>, vector<2x10xf32> -> vector<2x10xf32>
    %c0_21 = arith.constant 0 : index
    %c0_22 = arith.constant 0 : index
    %24 = vector.load %arg8[%c0_21, %c0_22] : memref<1x10xf32, #tpu.memory_space<vmem>>, vector<1x10xf32>
    %25 = vector.broadcast %24 : vector<1x10xf32> to vector<2x10xf32>
    %26 = arith.addf %23, %25 : vector<2x10xf32>
    %c0_23 = arith.constant 0 : index
    %c0_24 = arith.constant 0 : index
    %27 = vector.load %arg9[%c0_23, %c0_24] : memref<2x10xf32, #tpu.memory_space<vmem>>, vector<2x10xf32>
    tpu.vector_store %arg9[%c0_23, %c0_24], %26 {strides = array<i32>} : memref<2x10xf32, #tpu.memory_space<vmem>>, vector<2x10xf32>,
    return
  }
}

</mosaic_0001>

<llo_original>
// kernel: pruned_cnn_forward.1
$region0: #{pruned_cnn_forward.1}
  #allocation0 [shape = 'u32[]', space=smem, size = 0x4, offset = 0x4, fixed_abs, tag = 'smem constant byte address 0x4 - core index']
  #allocation1 [shape = 'u32[144,128]{1,0:T(1,128)}', space=vmem, size = 0x12000, scoped, tag = 'internal scratch']
  %s0 = inlined_call_operand.vmem [shape: f32[2,256], index: 0, kind: input, shape index: {}]
  %s1 = inlined_call_operand.vmem [shape: f32[256,784], index: 1, kind: input, shape index: {}]
  %s2 = inlined_call_operand.vmem [shape: f32[1,784], index: 2, kind: input, shape index: {}]
  %s3 = inlined_call_operand.vmem [shape: f32[784,144], index: 3, kind: input, shape index: {}]
  %s4 = inlined_call_operand.vmem [shape: f32[1,144], index: 4, kind: input, shape index: {}]
  %s5 = inlined_call_operand.vmem [shape: f32[144,16], index: 5, kind: input, shape index: {}]
  %s6 = inlined_call_operand.vmem [shape: f32[1,16], index: 6, kind: input, shape index: {}]
  %s7 = inlined_call_operand.vmem [shape: f32[16,10], index: 7, kind: input, shape index: {}]
  %s8 = inlined_call_operand.vmem [shape: f32[1,10], index: 8, kind: input, shape index: {}]
  %s9 = inlined_call_operand.hbm [shape: f32[2,10], index: 9, kind: output, shape index: {}]
  %s10 = sld [smem:[#allocation0]]
  $region46: #{pruned_cnn_forward.1} parent=0
    _
  %s12 = ssub.s32 1, %s10
  %s13 = scalar_select 0, %s12, %s10
  $region1: #{pruned_cnn_forward.1} parent=0
    #allocation2 [shape = 'u8[1024]{0}', space=vmem, size = 0x400, scoped, tag = 'output window, operand 0, single buffered']
    #allocation3 [shape = 's32[1]{0}', space=sflag, size = 0x4, scoped, tag = 'scoped memory for pruned_cnn_forward.1']
    %14 = vsyncpa [#allocation3], 0
    // Predicated region
    $region2: #{pruned_cnn_forward.1} parent=1 // pred_check
      _
    $region3: #{pruned_cnn_forward.1} parent=1 // pred_check_branch
      %16 = sbr.rel (0) target = $region5
    $region4: #{pruned_cnn_forward.1} parent=1 // pred_region
      _
    $region5: #{pruned_cnn_forward.1} parent=1 // pred_fallthru
      _
    // Predicated region
    $region6: #{pruned_cnn_forward.1} parent=1 // pred_check
      _
    $region7: #{pruned_cnn_forward.1} parent=1 // pred_check_branch
      %18 = sbr.rel (0) target = $region9
    $region8: #{pruned_cnn_forward.1} parent=1 // pred_region
      _
    $region9: #{pruned_cnn_forward.1} parent=1 // pred_fallthru
      _
    // Predicated region
    $region10: #{pruned_cnn_forward.1} parent=1 // pred_check
      _
    $region11: #{pruned_cnn_forward.1} parent=1 // pred_check_branch
      %20 = sbr.rel (0) target = $region13
    $region12: #{pruned_cnn_forward.1} parent=1 // pred_region
      _
    $region13: #{pruned_cnn_forward.1} parent=1 // pred_fallthru
      _
    // Predicated region
    $region14: #{pruned_cnn_forward.1} parent=1 // pred_check
      _
    $region15: #{pruned_cnn_forward.1} parent=1 // pred_check_branch
      %22 = sbr.rel (0) target = $region17
    $region16: #{pruned_cnn_forward.1} parent=1 // pred_region
      _
    $region17: #{pruned_cnn_forward.1} parent=1 // pred_fallthru
      _
    // Predicated region
    $region18: #{pruned_cnn_forward.1} parent=1 // pred_check
      _
    $region19: #{pruned_cnn_forward.1} parent=1 // pred_check_branch
      %24 = sbr.rel (0) target = $region21
    $region20: #{pruned_cnn_forward.1} parent=1 // pred_region
      _
    $region21: #{pruned_cnn_forward.1} parent=1 // pred_fallthru
      _
    // Predicated region
    $region22: #{pruned_cnn_forward.1} parent=1 // pred_check
      _
    $region23: #{pruned_cnn_forward.1} parent=1 // pred_check_branch
      %26 = sbr.rel (0) target = $region25
    $region24: #{pruned_cnn_forward.1} parent=1 // pred_region
      _
    $region25: #{pruned_cnn_forward.1} parent=1 // pred_fallthru
      _
    // Predicated region
    $region26: #{pruned_cnn_forward.1} parent=1 // pred_check
      _
    $region27: #{pruned_cnn_forward.1} parent=1 // pred_check_branch
      %28 = sbr.rel (0) target = $region29
    $region28: #{pruned_cnn_forward.1} parent=1 // pred_region
      _
    $region29: #{pruned_cnn_forward.1} parent=1 // pred_fallthru
      _
    // Predicated region
    $region30: #{pruned_cnn_forward.1} parent=1 // pred_check
      _
    $region31: #{pruned_cnn_forward.1} parent=1 // pred_check_branch
      %30 = sbr.rel (0) target = $region33
    $region32: #{pruned_cnn_forward.1} parent=1 // pred_region
      _
    $region33: #{pruned_cnn_forward.1} parent=1 // pred_fallthru
      _
    // Predicated region
    $region34: #{pruned_cnn_forward.1} parent=1 // pred_check
      _
    $region35: #{pruned_cnn_forward.1} parent=1 // pred_check_branch
      %32 = sbr.rel (0) target = $region37
    $region36: #{pruned_cnn_forward.1} parent=1 // pred_region
      _
    $region37: #{pruned_cnn_forward.1} parent=1 // pred_fallthru
      _
    %v33 = vld [vmem:[%s0] sm:$0xf]
    %v34 = vld [vmem:[%s1] sm:$0xff]
    %v35 = vld [vmem:[%s1 + $0x8] sm:$0xff]
    %v36 = vld [vmem:[%s1 + $0x10] sm:$0xff]
    %v37 = vld [vmem:[%s1 + $0x18] sm:$0xff]
    %v38 = vld [vmem:[%s1 + $0x20] sm:$0xff]
    %v39 = vld [vmem:[%s1 + $0x28] sm:$0xff]
    %v40 = vld [vmem:[%s1 + $0x30] sm:$0xff]
    %v41 = vld [vmem:[%s1 + $0x38] sm:$0xff]
    %v42 = vld [vmem:[%s1 + $0x40] sm:$0xff]
    %v43 = vld [vmem:[%s1 + $0x48] sm:$0xff]
    %v44 = vld [vmem:[%s1 + $0x50] sm:$0xff]
    %v45 = vld [vmem:[%s1 + $0x58] sm:$0xff]
    %v46 = vld [vmem:[%s1 + $0x60] sm:$0xff]
    %v47 = vld [vmem:[%s1 + $0x68] sm:$0xff]
    %v48 = vld [vmem:[%s1 + $0x70] sm:$0xff]
    %v49 = vld [vmem:[%s1 + $0x78] sm:$0xff]
    %v50 = vld [vmem:[%s1 + $0x80] sm:$0xff]
    %v51 = vld [vmem:[%s1 + $0x88] sm:$0xff]
    %v52 = vld [vmem:[%s1 + $0x90] sm:$0xff]
    %v53 = vld [vmem:[%s1 + $0x98] sm:$0xff]
    %v54 = vld [vmem:[%s1 + $0xa0] sm:$0xff]
    %v55 = vld [vmem:[%s1 + $0xa8] sm:$0xff]
    %v56 = vld [vmem:[%s1 + $0xb0] sm:$0xff]
    %v57 = vld [vmem:[%s1 + $0xb8] sm:$0xff]
    %v58 = vld [vmem:[%s1 + $0xc0] sm:$0xff]
    %v59 = vld [vmem:[%s1 + $0xc8] sm:$0xff]
    %v60 = vld [vmem:[%s1 + $0xd0] sm:$0xff]
    %v61 = vld [vmem:[%s1 + $0xd8] sm:$0xff]
    %v62 = vld [vmem:[%s1 + $0xe0] sm:$0xff]
    %v63 = vld [vmem:[%s1 + $0xe8] sm:$0xff]
    %v64 = vld [vmem:[%s1 + $0xf0] sm:$0xff]
    %v65 = vld [vmem:[%s1 + $0xf8] sm:$0xff]
    %v66 = vld [vmem:[%s1 + $0x100] sm:$0xff]
    %v67 = vld [vmem:[%s1 + $0x108] sm:$0xff]
    %v68 = vld [vmem:[%s1 + $0x110] sm:$0xff]
    %v69 = vld [vmem:[%s1 + $0x118] sm:$0xff]
    %v70 = vld [vmem:[%s1 + $0x120] sm:$0xff]
    %v71 = vld [vmem:[%s1 + $0x128] sm:$0xff]
    %v72 = vld [vmem:[%s1 + $0x130] sm:$0xff]
    %v73 = vld [vmem:[%s1 + $0x138] sm:$0xff]
    %v74 = vld [vmem:[%s1 + $0x140] sm:$0xff]
    %v75 = vld [vmem:[%s1 + $0x148] sm:$0xff]
    %v76 = vld [vmem:[%s1 + $0x150] sm:$0xff]
    %v77 = vld [vmem:[%s1 + $0x158] sm:$0xff]
    %v78 = vld [vmem:[%s1 + $0x160] sm:$0xff]
    %v79 = vld [vmem:[%s1 + $0x168] sm:$0xff]
    %v80 = vld [vmem:[%s1 + $0x170] sm:$0xff]
    %v81 = vld [vmem:[%s1 + $0x178] sm:$0xff]
    %v82 = vld [vmem:[%s1 + $0x180] sm:$0xff]
    %v83 = vld [vmem:[%s1 + $0x188] sm:$0xff]
    %v84 = vld [vmem:[%s1 + $0x190] sm:$0xff]
    %v85 = vld [vmem:[%s1 + $0x198] sm:$0xff]
    %v86 = vld [vmem:[%s1 + $0x1a0] sm:$0xff]
    %v87 = vld [vmem:[%s1 + $0x1a8] sm:$0xff]
    %v88 = vld [vmem:[%s1 + $0x1b0] sm:$0xff]
    %v89 = vld [vmem:[%s1 + $0x1b8] sm:$0xff]
    %v90 = vld [vmem:[%s1 + $0x1c0] sm:$0xff]
    %v91 = vld [vmem:[%s1 + $0x1c8] sm:$0xff]
    %v92 = vld [vmem:[%s1 + $0x1d0] sm:$0xff]
    %v93 = vld [vmem:[%s1 + $0x1d8] sm:$0xff]
    %v94 = vld [vmem:[%s1 + $0x1e0] sm:$0xff]
    %v95 = vld [vmem:[%s1 + $0x1e8] sm:$0xff]
    %v96 = vld [vmem:[%s1 + $0x1f0] sm:$0xff]
    %v97 = vld [vmem:[%s1 + $0x1f8] sm:$0xff]
    %v98 = vld [vmem:[%s1 + $0x200] sm:$0xff]
    %v99 = vld [vmem:[%s1 + $0x208] sm:$0xff]
    %v100 = vld [vmem:[%s1 + $0x210] sm:$0xff]
    %v101 = vld [vmem:[%s1 + $0x218] sm:$0xff]
    %v102 = vld [vmem:[%s1 + $0x220] sm:$0xff]
    %v103 = vld [vmem:[%s1 + $0x228] sm:$0xff]
    %v104 = vld [vmem:[%s1 + $0x230] sm:$0xff]
    %v105 = vld [vmem:[%s1 + $0x238] sm:$0xff]
    %v106 = vld [vmem:[%s1 + $0x240] sm:$0xff]
    %v107 = vld [vmem:[%s1 + $0x248] sm:$0xff]
    %v108 = vld [vmem:[%s1 + $0x250] sm:$0xff]
    %v109 = vld [vmem:[%s1 + $0x258] sm:$0xff]
    %v110 = vld [vmem:[%s1 + $0x260] sm:$0xff]
    %v111 = vld [vmem:[%s1 + $0x268] sm:$0xff]
    %v112 = vld [vmem:[%s1 + $0x270] sm:$0xff]
    %v113 = vld [vmem:[%s1 + $0x278] sm:$0xff]
    %v114 = vld [vmem:[%s1 + $0x280] sm:$0xff]
    %v115 = vld [vmem:[%s1 + $0x288] sm:$0xff]
    %v116 = vld [vmem:[%s1 + $0x290] sm:$0xff]
    %v117 = vld [vmem:[%s1 + $0x298] sm:$0xff]
    %v118 = vld [vmem:[%s1 + $0x2a0] sm:$0xff]
    %v119 = vld [vmem:[%s1 + $0x2a8] sm:$0xff]
    %v120 = vld [vmem:[%s1 + $0x2b0] sm:$0xff]
    %v121 = vld [vmem:[%s1 + $0x2b8] sm:$0xff]
    %v122 = vld [vmem:[%s1 + $0x2c0] sm:$0xff]
    %v123 = vld [vmem:[%s1 + $0x2c8] sm:$0xff]
    %v124 = vld [vmem:[%s1 + $0x2d0] sm:$0xff]
    %v125 = vld [vmem:[%s1 + $0x2d8] sm:$0xff]
    %v126 = vld [vmem:[%s1 + $0x2e0] sm:$0xff]
    %v127 = vld [vmem:[%s1 + $0x2e8] sm:$0xff]
    %v128 = vld [vmem:[%s1 + $0x2f0] sm:$0xff]
    %v129 = vld [vmem:[%s1 + $0x2f8] sm:$0xff]
    %v130 = vld [vmem:[%s1 + $0x300] sm:$0xff]
    %v131 = vld [vmem:[%s1 + $0x308] sm:$0xff]
    %v132 = vld [vmem:[%s1 + $0x310] sm:$0xff]
    %v133 = vld [vmem:[%s1 + $0x318] sm:$0xff]
    %v134 = vld [vmem:[%s1 + $0x320] sm:$0xff]
    %v135 = vld [vmem:[%s1 + $0x328] sm:$0xff]
    %v136 = vld [vmem:[%s1 + $0x330] sm:$0xff]
    %v137 = vld [vmem:[%s1 + $0x338] sm:$0xff]
    %v138 = vld [vmem:[%s1 + $0x340] sm:$0xff]
    %v139 = vld [vmem:[%s1 + $0x348] sm:$0xff]
    %v140 = vld [vmem:[%s1 + $0x350] sm:$0xff]
    %v141 = vld [vmem:[%s1 + $0x358] sm:$0xff]
    %v142 = vld [vmem:[%s1 + $0x360] sm:$0xff]
    %v143 = vld [vmem:[%s1 + $0x368] sm:$0xff]
    %v144 = vld [vmem:[%s1 + $0x370] sm:$0xff]
    %v145 = vld [vmem:[%s1 + $0x378] sm:$0xff]
    %v146 = vld [vmem:[%s1 + $0x380] sm:$0xff]
    %v147 = vld [vmem:[%s1 + $0x388] sm:$0xff]
    %v148 = vld [vmem:[%s1 + $0x390] sm:$0xff]
    %v149 = vld [vmem:[%s1 + $0x398] sm:$0xff]
    %v150 = vld [vmem:[%s1 + $0x3a0] sm:$0xff]
    %v151 = vld [vmem:[%s1 + $0x3a8] sm:$0xff]
    %v152 = vld [vmem:[%s1 + $0x3b0] sm:$0xff]
    %v153 = vld [vmem:[%s1 + $0x3b8] sm:$0xff]
    %v154 = vld [vmem:[%s1 + $0x3c0] sm:$0xff]
    %v155 = vld [vmem:[%s1 + $0x3c8] sm:$0xff]
    %v156 = vld [vmem:[%s1 + $0x3d0] sm:$0xff]
    %v157 = vld [vmem:[%s1 + $0x3d8] sm:$0xff]
    %v158 = vld [vmem:[%s1 + $0x3e0] sm:$0xff]
    %v159 = vld [vmem:[%s1 + $0x3e8] sm:$0xff]
    %v160 = vld [vmem:[%s1 + $0x3f0] sm:$0xff]
    %v161 = vld [vmem:[%s1 + $0x3f8] sm:$0xff]
    %v162 = vld [vmem:[%s1 + $0x400] sm:$0xff]
    %v163 = vld [vmem:[%s1 + $0x408] sm:$0xff]
    %v164 = vld [vmem:[%s1 + $0x410] sm:$0xff]
    %v165 = vld [vmem:[%s1 + $0x418] sm:$0xff]
    %v166 = vld [vmem:[%s1 + $0x420] sm:$0xff]
    %v167 = vld [vmem:[%s1 + $0x428] sm:$0xff]
    %v168 = vld [vmem:[%s1 + $0x430] sm:$0xff]
    %v169 = vld [vmem:[%s1 + $0x438] sm:$0xff]
    %v170 = vld [vmem:[%s1 + $0x440] sm:$0xff]
    %v171 = vld [vmem:[%s1 + $0x448] sm:$0xff]
    %v172 = vld [vmem:[%s1 + $0x450] sm:$0xff]
    %v173 = vld [vmem:[%s1 + $0x458] sm:$0xff]
    %v174 = vld [vmem:[%s1 + $0x460] sm:$0xff]
    %v175 = vld [vmem:[%s1 + $0x468] sm:$0xff]
    %v176 = vld [vmem:[%s1 + $0x470] sm:$0xff]
    %v177 = vld [vmem:[%s1 + $0x478] sm:$0xff]
    %v178 = vld [vmem:[%s1 + $0x480] sm:$0xff]
    %v179 = vld [vmem:[%s1 + $0x488] sm:$0xff]
    %v180 = vld [vmem:[%s1 + $0x490] sm:$0xff]
    %v181 = vld [vmem:[%s1 + $0x498] sm:$0xff]
    %v182 = vld [vmem:[%s1 + $0x4a0] sm:$0xff]
    %v183 = vld [vmem:[%s1 + $0x4a8] sm:$0xff]
    %v184 = vld [vmem:[%s1 + $0x4b0] sm:$0xff]
    %v185 = vld [vmem:[%s1 + $0x4b8] sm:$0xff]
    %v186 = vld [vmem:[%s1 + $0x4c0] sm:$0xff]
    %v187 = vld [vmem:[%s1 + $0x4c8] sm:$0xff]
    %v188 = vld [vmem:[%s1 + $0x4d0] sm:$0xff]
    %v189 = vld [vmem:[%s1 + $0x4d8] sm:$0xff]
    %v190 = vld [vmem:[%s1 + $0x4e0] sm:$0xff]
    %v191 = vld [vmem:[%s1 + $0x4e8] sm:$0xff]
    %v192 = vld [vmem:[%s1 + $0x4f0] sm:$0xff]
    %v193 = vld [vmem:[%s1 + $0x4f8] sm:$0xff]
    %v194 = vld [vmem:[%s1 + $0x500] sm:$0xff]
    %v195 = vld [vmem:[%s1 + $0x508] sm:$0xff]
    %v196 = vld [vmem:[%s1 + $0x510] sm:$0xff]
    %v197 = vld [vmem:[%s1 + $0x518] sm:$0xff]
    %v198 = vld [vmem:[%s1 + $0x520] sm:$0xff]
    %v199 = vld [vmem:[%s1 + $0x528] sm:$0xff]
    %v200 = vld [vmem:[%s1 + $0x530] sm:$0xff]
    %v201 = vld [vmem:[%s1 + $0x538] sm:$0xff]
    %v202 = vld [vmem:[%s1 + $0x540] sm:$0xff]
    %v203 = vld [vmem:[%s1 + $0x548] sm:$0xff]
    %v204 = vld [vmem:[%s1 + $0x550] sm:$0xff]
    %v205 = vld [vmem:[%s1 + $0x558] sm:$0xff]
    %v206 = vld [vmem:[%s1 + $0x560] sm:$0xff]
    %v207 = vld [vmem:[%s1 + $0x568] sm:$0xff]
    %v208 = vld [vmem:[%s1 + $0x570] sm:$0xff]
    %v209 = vld [vmem:[%s1 + $0x578] sm:$0xff]
    %v210 = vld [vmem:[%s1 + $0x580] sm:$0xff]
    %v211 = vld [vmem:[%s1 + $0x588] sm:$0xff]
    %v212 = vld [vmem:[%s1 + $0x590] sm:$0xff]
    %v213 = vld [vmem:[%s1 + $0x598] sm:$0xff]
    %v214 = vld [vmem:[%s1 + $0x5a0] sm:$0xff]
    %v215 = vld [vmem:[%s1 + $0x5a8] sm:$0xff]
    %v216 = vld [vmem:[%s1 + $0x5b0] sm:$0xff]
    %v217 = vld [vmem:[%s1 + $0x5b8] sm:$0xff]
    %v218 = vld [vmem:[%s1 + $0x5c0] sm:$0xff]
    %v219 = vld [vmem:[%s1 + $0x5c8] sm:$0xff]
    %v220 = vld [vmem:[%s1 + $0x5d0] sm:$0xff]
    %v221 = vld [vmem:[%s1 + $0x5d8] sm:$0xff]
    %v222 = vld [vmem:[%s1 + $0x5e0] sm:$0xff]
    %v223 = vld [vmem:[%s1 + $0x5e8] sm:$0xff]
    %v224 = vld [vmem:[%s1 + $0x5f0] sm:$0xff]
    %v225 = vld [vmem:[%s1 + $0x5f8] sm:$0xff]
    %v226 = vld [vmem:[%s1 + $0x600] sm:$0xff]
    %v227 = vld [vmem:[%s1 + $0x608] sm:$0xff]
    %v228 = vld [vmem:[%s1 + $0x610] sm:$0xff]
    %v229 = vld [vmem:[%s1 + $0x618] sm:$0xff]
    %v230 = vld [vmem:[%s1 + $0x620] sm:$0xff]
    %v231 = vld [vmem:[%s1 + $0x628] sm:$0xff]
    %v232 = vld [vmem:[%s1 + $0x630] sm:$0xff]
    %v233 = vld [vmem:[%s1 + $0x638] sm:$0xff]
    %v234 = vld [vmem:[%s1 + $0x640] sm:$0xff]
    %v235 = vld [vmem:[%s1 + $0x648] sm:$0xff]
    %v236 = vld [vmem:[%s1 + $0x650] sm:$0xff]
    %v237 = vld [vmem:[%s1 + $0x658] sm:$0xff]
    %v238 = vld [vmem:[%s1 + $0x660] sm:$0xff]
    %v239 = vld [vmem:[%s1 + $0x668] sm:$0xff]
    %v240 = vld [vmem:[%s1 + $0x670] sm:$0xff]
    %v241 = vld [vmem:[%s1 + $0x678] sm:$0xff]
    %v242 = vld [vmem:[%s1 + $0x680] sm:$0xff]
    %v243 = vld [vmem:[%s1 + $0x688] sm:$0xff]
    %v244 = vld [vmem:[%s1 + $0x690] sm:$0xff]
    %v245 = vld [vmem:[%s1 + $0x698] sm:$0xff]
    %v246 = vld [vmem:[%s1 + $0x6a0] sm:$0xff]
    %v247 = vld [vmem:[%s1 + $0x6a8] sm:$0xff]
    %v248 = vld [vmem:[%s1 + $0x6b0] sm:$0xff]
    %v249 = vld [vmem:[%s1 + $0x6b8] sm:$0xff]
    %v250 = vld [vmem:[%s1 + $0x6c0] sm:$0xff]
    %v251 = vld [vmem:[%s1 + $0x6c8] sm:$0xff]
    %v252 = vld [vmem:[%s1 + $0x6d0] sm:$0xff]
    %v253 = vld [vmem:[%s1 + $0x6d8] sm:$0xff]
    %v254 = vld [vmem:[%s1 + $0x6e0] sm:$0xff]
    %v255 = vld [vmem:[%s1 + $0x6e8] sm:$0xff]
    %v256 = vld [vmem:[%s1 + $0x6f0] sm:$0xff]
    %v257 = vld [vmem:[%s1 + $0x6f8] sm:$0xff]
    %v258 = vld [vmem:[%s2] sm:$0x7f]
    %v260 = vlaneseq
    %v261 = vshrl.u32 %v260, 7
    %v262 = vsub.s32 0, %v261
    %v263 = vrot.slane %v258, %v262
    %v264 = vlaneseq
    %v265 = vshrl.u32 %v264, 7
    %v266 = vsub.s32 1, %v265
    %v267 = vrot.slane %v258, %v266
    %v268 = vlaneseq
    %v269 = vshrl.u32 %v268, 7
    %v270 = vsub.s32 2, %v269
    %v271 = vrot.slane %v258, %v270
    %v272 = vlaneseq
    %v273 = vshrl.u32 %v272, 7
    %v274 = vsub.s32 3, %v273
    %v275 = vrot.slane %v258, %v274
    %v276 = vlaneseq
    %v277 = vshrl.u32 %v276, 7
    %v278 = vsub.s32 4, %v277
    %v279 = vrot.slane %v258, %v278
    %v280 = vlaneseq
    %v281 = vshrl.u32 %v280, 7
    %v282 = vsub.s32 5, %v281
    %v283 = vrot.slane %v258, %v282
    %v284 = vlaneseq
    %v285 = vshrl.u32 %v284, 7
    %v286 = vsub.s32 6, %v285
    %v287 = vrot.slane %v258, %v286
    %v297 = vunpack.c.l.s4 1983009808
    %v298 = vunpack.c.0.s8 %v297
    %v299 = vlaneseq
    %v300 = vshrl.u32 %v299, 7
    %v301 = vsub.s32 %v298, %v300
    %v302 = vrot.slane %v33, %v301
    %v303 = vcombine.high %v302, %v302
    %306 = vmatprep.subr.mxu0 %v35
    %307 = vmatpush1.msra.mxu0 %v34
    %308 = vmatprep.subr.mxu0 %v42
    %309 = vmatpush1.msra.mxu0 %v41
    %310 = vmatprep.subr.mxu0 %v49
    %311 = vmatpush1.msra.mxu0 %v48
    %312 = vmatprep.subr.mxu0 %v56
    %313 = vmatpush1.msra.mxu0 %v55
    %314 = vmatprep.subr.mxu0 %v63
    %315 = vmatpush1.msra.mxu0 %v62
    %316 = vmatprep.subr.mxu0 %v70
    %317 = vmatpush1.msra.mxu0 %v69
    %318 = vmatprep.subr.mxu0 %v77
    %319 = vmatpush1.msra.mxu0 %v76
    %320 = vmatprep.subr.mxu0 %v84
    %321 = vmatpush1.msra.mxu0 %v83
    %322 = vmatprep.subr.mxu0 %v91
    %323 = vmatpush1.msra.mxu0 %v90
    %324 = vmatprep.subr.mxu0 %v98
    %325 = vmatpush1.msra.mxu0 %v97
    %326 = vmatprep.subr.mxu0 %v105
    %327 = vmatpush1.msra.mxu0 %v104
    %328 = vmatprep.subr.mxu0 %v112
    %329 = vmatpush1.msra.mxu0 %v111
    %330 = vmatprep.subr.mxu0 %v119
    %331 = vmatpush1.msra.mxu0 %v118
    %332 = vmatprep.subr.mxu0 %v126
    %333 = vmatpush1.msra.mxu0 %v125
    %334 = vmatprep.subr.mxu0 %v133
    %335 = vmatpush1.msra.mxu0 %v132
    %336 = vmatprep.subr.mxu0 %v140
    %337 = vmatpush1.msra.mxu0 %v139
    %338 = vmatprep.subr.mxu0 %v147
    %339 = vmatpush1.msra.mxu0 %v146
    %340 = vmatprep.subr.mxu0 %v154
    %341 = vmatpush1.msra.mxu0 %v153
    %342 = vmatprep.subr.mxu0 %v161
    %343 = vmatpush1.msra.mxu0 %v160
    %344 = vmatprep.subr.mxu0 %v168
    %345 = vmatpush1.msra.mxu0 %v167
    %346 = vmatprep.subr.mxu0 %v175
    %347 = vmatpush1.msra.mxu0 %v174
    %348 = vmatprep.subr.mxu0 %v182
    %349 = vmatpush1.msra.mxu0 %v181
    %350 = vmatprep.subr.mxu0 %v189
    %351 = vmatpush1.msra.mxu0 %v188
    %352 = vmatprep.subr.mxu0 %v196
    %353 = vmatpush1.msra.mxu0 %v195
    %354 = vmatprep.subr.mxu0 %v203
    %355 = vmatpush1.msra.mxu0 %v202
    %356 = vmatprep.subr.mxu0 %v210
    %357 = vmatpush1.msra.mxu0 %v209
    %358 = vmatprep.subr.mxu0 %v217
    %359 = vmatpush1.msra.mxu0 %v216
    %360 = vmatprep.subr.mxu0 %v224
    %361 = vmatpush1.msra.mxu0 %v223
    %362 = vmatprep.subr.mxu0 %v231
    %363 = vmatpush1.msra.mxu0 %v230
    %364 = vmatprep.subr.mxu0 %v238
    %365 = vmatpush1.msra.mxu0 %v237
    %366 = vmatprep.subr.mxu0 %v245
    %367 = vmatpush1.msra.mxu0 %v244
    %368 = vmatprep.subr.mxu0 %v252
    %369 = vmatpush1.msra.mxu0 %v251
    %370 = vmatprep.mubr.f32.mxu0 %v303
    %371 = vmatmul.mubr.f32.gmra.mrb[0].mxu0 %v302
    %v372 = vpop.f32.mrb[0].mxu0
    %v373 = vadd.f32 %v263, %v372
    %v374 = vpop.f32.mrb[0].mxu0
    %v375 = vadd.f32 %v267, %v374
    %376 = vdwg.mxu0
    %377 = vmatprep.subr.mxu0 %v37
    %378 = vmatpush1.msra.mxu0 %v36
    %379 = vmatprep.subr.mxu0 %v44
    %380 = vmatpush1.msra.mxu0 %v43
    %381 = vmatprep.subr.mxu0 %v51
    %382 = vmatpush1.msra.mxu0 %v50
    %383 = vmatprep.subr.mxu0 %v58
    %384 = vmatpush1.msra.mxu0 %v57
    %385 = vmatprep.subr.mxu0 %v65
    %386 = vmatpush1.msra.mxu0 %v64
    %387 = vmatprep.subr.mxu0 %v72
    %388 = vmatpush1.msra.mxu0 %v71
    %389 = vmatprep.subr.mxu0 %v79
    %390 = vmatpush1.msra.mxu0 %v78
    %391 = vmatprep.subr.mxu0 %v86
    %392 = vmatpush1.msra.mxu0 %v85
    %393 = vmatprep.subr.mxu0 %v93
    %394 = vmatpush1.msra.mxu0 %v92
    %395 = vmatprep.subr.mxu0 %v100
    %396 = vmatpush1.msra.mxu0 %v99
    %397 = vmatprep.subr.mxu0 %v107
    %398 = vmatpush1.msra.mxu0 %v106
    %399 = vmatprep.subr.mxu0 %v114
    %400 = vmatpush1.msra.mxu0 %v113
    %401 = vmatprep.subr.mxu0 %v121
    %402 = vmatpush1.msra.mxu0 %v120
    %403 = vmatprep.subr.mxu0 %v128
    %404 = vmatpush1.msra.mxu0 %v127
    %405 = vmatprep.subr.mxu0 %v135
    %406 = vmatpush1.msra.mxu0 %v134
    %407 = vmatprep.subr.mxu0 %v142
    %408 = vmatpush1.msra.mxu0 %v141
    %409 = vmatprep.subr.mxu0 %v149
    %410 = vmatpush1.msra.mxu0 %v148
    %411 = vmatprep.subr.mxu0 %v156
    %412 = vmatpush1.msra.mxu0 %v155
    %413 = vmatprep.subr.mxu0 %v163
    %414 = vmatpush1.msra.mxu0 %v162
    %415 = vmatprep.subr.mxu0 %v170
    %416 = vmatpush1.msra.mxu0 %v169
    %417 = vmatprep.subr.mxu0 %v177
    %418 = vmatpush1.msra.mxu0 %v176
    %419 = vmatprep.subr.mxu0 %v184
    %420 = vmatpush1.msra.mxu0 %v183
    %421 = vmatprep.subr.mxu0 %v191
    %422 = vmatpush1.msra.mxu0 %v190
    %423 = vmatprep.subr.mxu0 %v198
    %424 = vmatpush1.msra.mxu0 %v197
    %425 = vmatprep.subr.mxu0 %v205
    %426 = vmatpush1.msra.mxu0 %v204
    %427 = vmatprep.subr.mxu0 %v212
    %428 = vmatpush1.msra.mxu0 %v211
    %429 = vmatprep.subr.mxu0 %v219
    %430 = vmatpush1.msra.mxu0 %v218
    %431 = vmatprep.subr.mxu0 %v226
    %432 = vmatpush1.msra.mxu0 %v225
    %433 = vmatprep.subr.mxu0 %v233
    %434 = vmatpush1.msra.mxu0 %v232
    %435 = vmatprep.subr.mxu0 %v240
    %436 = vmatpush1.msra.mxu0 %v239
    %437 = vmatprep.subr.mxu0 %v247
    %438 = vmatpush1.msra.mxu0 %v246
    %439 = vmatprep.subr.mxu0 %v254
    %440 = vmatpush1.msra.mxu0 %v253
    %441 = vmatprep.mubr.f32.mxu0 %v303
    %442 = vmatmul.mubr.f32.gmra.mrb[0].mxu0 %v302
    %v443 = vpop.f32.mrb[0].mxu0
    %v444 = vadd.f32 %v271, %v443
    %v445 = vpop.f32.mrb[0].mxu0
    %v446 = vadd.f32 %v275, %v445
    %447 = vdwg.mxu0
    %448 = vmatprep.subr.mxu0 %v39
    %449 = vmatpush1.msra.mxu0 %v38
    %450 = vmatprep.subr.mxu0 %v46
    %451 = vmatpush1.msra.mxu0 %v45
    %452 = vmatprep.subr.mxu0 %v53
    %453 = vmatpush1.msra.mxu0 %v52
    %454 = vmatprep.subr.mxu0 %v60
    %455 = vmatpush1.msra.mxu0 %v59
    %456 = vmatprep.subr.mxu0 %v67
    %457 = vmatpush1.msra.mxu0 %v66
    %458 = vmatprep.subr.mxu0 %v74
    %459 = vmatpush1.msra.mxu0 %v73
    %460 = vmatprep.subr.mxu0 %v81
    %461 = vmatpush1.msra.mxu0 %v80
    %462 = vmatprep.subr.mxu0 %v88
    %463 = vmatpush1.msra.mxu0 %v87
    %464 = vmatprep.subr.mxu0 %v95
    %465 = vmatpush1.msra.mxu0 %v94
    %466 = vmatprep.subr.mxu0 %v102
    %467 = vmatpush1.msra.mxu0 %v101
    %468 = vmatprep.subr.mxu0 %v109
    %469 = vmatpush1.msra.mxu0 %v108
    %470 = vmatprep.subr.mxu0 %v116
    %471 = vmatpush1.msra.mxu0 %v115
    %472 = vmatprep.subr.mxu0 %v123
    %473 = vmatpush1.msra.mxu0 %v122
    %474 = vmatprep.subr.mxu0 %v130
    %475 = vmatpush1.msra.mxu0 %v129
    %476 = vmatprep.subr.mxu0 %v137
    %477 = vmatpush1.msra.mxu0 %v136
    %478 = vmatprep.subr.mxu0 %v144
    %479 = vmatpush1.msra.mxu0 %v143
    %480 = vmatprep.subr.mxu0 %v151
    %481 = vmatpush1.msra.mxu0 %v150
    %482 = vmatprep.subr.mxu0 %v158
    %483 = vmatpush1.msra.mxu0 %v157
    %484 = vmatprep.subr.mxu0 %v165
    %485 = vmatpush1.msra.mxu0 %v164
    %486 = vmatprep.subr.mxu0 %v172
    %487 = vmatpush1.msra.mxu0 %v171
    %488 = vmatprep.subr.mxu0 %v179
    %489 = vmatpush1.msra.mxu0 %v178
    %490 = vmatprep.subr.mxu0 %v186
    %491 = vmatpush1.msra.mxu0 %v185
    %492 = vmatprep.subr.mxu0 %v193
    %493 = vmatpush1.msra.mxu0 %v192
    %494 = vmatprep.subr.mxu0 %v200
    %495 = vmatpush1.msra.mxu0 %v199
    %496 = vmatprep.subr.mxu0 %v207
    %497 = vmatpush1.msra.mxu0 %v206
    %498 = vmatprep.subr.mxu0 %v214
    %499 = vmatpush1.msra.mxu0 %v213
    %500 = vmatprep.subr.mxu0 %v221
    %501 = vmatpush1.msra.mxu0 %v220
    %502 = vmatprep.subr.mxu0 %v228
    %503 = vmatpush1.msra.mxu0 %v227
    %504 = vmatprep.subr.mxu0 %v235
    %505 = vmatpush1.msra.mxu0 %v234
    %506 = vmatprep.subr.mxu0 %v242
    %507 = vmatpush1.msra.mxu0 %v241
    %508 = vmatprep.subr.mxu0 %v249
    %509 = vmatpush1.msra.mxu0 %v248
    %510 = vmatprep.subr.mxu0 %v256
    %511 = vmatpush1.msra.mxu0 %v255
    %512 = vmatprep.mubr.f32.mxu0 %v303
    %513 = vmatmul.mubr.f32.gmra.mrb[0].mxu0 %v302
    %v514 = vpop.f32.mrb[0].mxu0
    %v515 = vadd.f32 %v279, %v514
    %v516 = vpop.f32.mrb[0].mxu0
    %v517 = vadd.f32 %v283, %v516
    %518 = vdwg.mxu0
    %519 = vmatprep.subr.mxu0 0.0
    %520 = vmatpush1.msra.mxu0 %v40
    %521 = vmatprep.subr.mxu0 0.0
    %522 = vmatpush1.msra.mxu0 %v47
    %523 = vmatprep.subr.mxu0 0.0
    %524 = vmatpush1.msra.mxu0 %v54
    %525 = vmatprep.subr.mxu0 0.0
    %526 = vmatpush1.msra.mxu0 %v61
    %527 = vmatprep.subr.mxu0 0.0
    %528 = vmatpush1.msra.mxu0 %v68
    %529 = vmatprep.subr.mxu0 0.0
    %530 = vmatpush1.msra.mxu0 %v75
    %531 = vmatprep.subr.mxu0 0.0
    %532 = vmatpush1.msra.mxu0 %v82
    %533 = vmatprep.subr.mxu0 0.0
    %534 = vmatpush1.msra.mxu0 %v89
    %535 = vmatprep.subr.mxu0 0.0
    %536 = vmatpush1.msra.mxu0 %v96
    %537 = vmatprep.subr.mxu0 0.0
    %538 = vmatpush1.msra.mxu0 %v103
    %539 = vmatprep.subr.mxu0 0.0
    %540 = vmatpush1.msra.mxu0 %v110
    %541 = vmatprep.subr.mxu0 0.0
    %542 = vmatpush1.msra.mxu0 %v117
    %543 = vmatprep.subr.mxu0 0.0
    %544 = vmatpush1.msra.mxu0 %v124
    %545 = vmatprep.subr.mxu0 0.0
    %546 = vmatpush1.msra.mxu0 %v131
    %547 = vmatprep.subr.mxu0 0.0
    %548 = vmatpush1.msra.mxu0 %v138
    %549 = vmatprep.subr.mxu0 0.0
    %550 = vmatpush1.msra.mxu0 %v145
    %551 = vmatprep.subr.mxu0 0.0
    %552 = vmatpush1.msra.mxu0 %v152
    %553 = vmatprep.subr.mxu0 0.0
    %554 = vmatpush1.msra.mxu0 %v159
    %555 = vmatprep.subr.mxu0 0.0
    %556 = vmatpush1.msra.mxu0 %v166
    %557 = vmatprep.subr.mxu0 0.0
    %558 = vmatpush1.msra.mxu0 %v173
    %559 = vmatprep.subr.mxu0 0.0
    %560 = vmatpush1.msra.mxu0 %v180
    %561 = vmatprep.subr.mxu0 0.0
    %562 = vmatpush1.msra.mxu0 %v187
    %563 = vmatprep.subr.mxu0 0.0
    %564 = vmatpush1.msra.mxu0 %v194
    %565 = vmatprep.subr.mxu0 0.0
    %566 = vmatpush1.msra.mxu0 %v201
    %567 = vmatprep.subr.mxu0 0.0
    %568 = vmatpush1.msra.mxu0 %v208
    %569 = vmatprep.subr.mxu0 0.0
    %570 = vmatpush1.msra.mxu0 %v215
    %571 = vmatprep.subr.mxu0 0.0
    %572 = vmatpush1.msra.mxu0 %v222
    %573 = vmatprep.subr.mxu0 0.0
    %574 = vmatpush1.msra.mxu0 %v229
    %575 = vmatprep.subr.mxu0 0.0
    %576 = vmatpush1.msra.mxu0 %v236
    %577 = vmatprep.subr.mxu0 0.0
    %578 = vmatpush1.msra.mxu0 %v243
    %579 = vmatprep.subr.mxu0 0.0
    %580 = vmatpush1.msra.mxu0 %v250
    %581 = vmatprep.subr.mxu0 0.0
    %582 = vmatpush1.msra.mxu0 %v257
    %583 = vmatprep.mubr.f32.mxu0 %v303
    %584 = vmatmul.mubr.f32.gmra.mrb[0].mxu0 %v302
    %v585 = vpop.f32.mrb[0].mxu0
    %v586 = vadd.f32 %v287, %v585
    %v587 = vpop.f32.mrb[0].mxu0
    %588 = vdwg.mxu0
    %v589 = vmax.f32 %v373, 0.0
    %v590 = vmax.f32 %v375, 0.0
    %v591 = vmax.f32 %v444, 0.0
    %v592 = vmax.f32 %v446, 0.0
    %v593 = vmax.f32 %v515, 0.0
    %v594 = vmax.f32 %v517, 0.0
    %v595 = vmax.f32 %v586, 0.0
    %v596 = vld [vmem:[%s3] sm:$0xff]
    %v597 = vld [vmem:[%s3 + $0x8] sm:$0xff]
    %v598 = vld [vmem:[%s3 + $0x10] sm:$0xff]
    %v599 = vld [vmem:[%s3 + $0x18] sm:$0xff]
    %v600 = vld [vmem:[%s3 + $0x20] sm:$0xff]
    %v601 = vld [vmem:[%s3 + $0x28] sm:$0xff]
    %v602 = vld [vmem:[%s3 + $0x30] sm:$0xff]
    %v603 = vld [vmem:[%s3 + $0x38] sm:$0xff]
    %v604 = vld [vmem:[%s3 + $0x40] sm:$0xff]
    %v605 = vld [vmem:[%s3 + $0x48] sm:$0xff]
    %v606 = vld [vmem:[%s3 + $0x50] sm:$0xff]
    %v607 = vld [vmem:[%s3 + $0x58] sm:$0xff]
    %v608 = vld [vmem:[%s3 + $0x60] sm:$0xff]
    %v609 = vld [vmem:[%s3 + $0x68] sm:$0xff]
    %v610 = vld [vmem:[%s3 + $0x70] sm:$0xff]
    %v611 = vld [vmem:[%s3 + $0x78] sm:$0xff]
    %v612 = vld [vmem:[%s3 + $0x80] sm:$0xff]
    %v613 = vld [vmem:[%s3 + $0x88] sm:$0xff]
    %v614 = vld [vmem:[%s3 + $0x90] sm:$0xff]
    %v615 = vld [vmem:[%s3 + $0x98] sm:$0xff]
    %v616 = vld [vmem:[%s3 + $0xa0] sm:$0xff]
    %v617 = vld [vmem:[%s3 + $0xa8] sm:$0xff]
    %v618 = vld [vmem:[%s3 + $0xb0] sm:$0xff]
    %v619 = vld [vmem:[%s3 + $0xb8] sm:$0xff]
    %v620 = vld [vmem:[%s3 + $0xc0] sm:$0xff]
    %v621 = vld [vmem:[%s3 + $0xc8] sm:$0xff]
    %v622 = vld [vmem:[%s3 + $0xd0] sm:$0xff]
    %v623 = vld [vmem:[%s3 + $0xd8] sm:$0xff]
    %v624 = vld [vmem:[%s3 + $0xe0] sm:$0xff]
    %v625 = vld [vmem:[%s3 + $0xe8] sm:$0xff]
    %v626 = vld [vmem:[%s3 + $0xf0] sm:$0xff]
    %v627 = vld [vmem:[%s3 + $0xf8] sm:$0xff]
    %v628 = vld [vmem:[%s3 + $0x100] sm:$0xff]
    %v629 = vld [vmem:[%s3 + $0x108] sm:$0xff]
    %v630 = vld [vmem:[%s3 + $0x110] sm:$0xff]
    %v631 = vld [vmem:[%s3 + $0x118] sm:$0xff]
    %v632 = vld [vmem:[%s3 + $0x120] sm:$0xff]
    %v633 = vld [vmem:[%s3 + $0x128] sm:$0xff]
    %v634 = vld [vmem:[%s3 + $0x130] sm:$0xff]
    %v635 = vld [vmem:[%s3 + $0x138] sm:$0xff]
    %v636 = vld [vmem:[%s3 + $0x140] sm:$0xff]
    %v637 = vld [vmem:[%s3 + $0x148] sm:$0xff]
    %v638 = vld [vmem:[%s3 + $0x150] sm:$0xff]
    %v639 = vld [vmem:[%s3 + $0x158] sm:$0xff]
    %v640 = vld [vmem:[%s3 + $0x160] sm:$0xff]
    %v641 = vld [vmem:[%s3 + $0x168] sm:$0xff]
    %v642 = vld [vmem:[%s3 + $0x170] sm:$0xff]
    %v643 = vld [vmem:[%s3 + $0x178] sm:$0xff]
    %v644 = vld [vmem:[%s3 + $0x180] sm:$0xff]
    %v645 = vld [vmem:[%s3 + $0x188] sm:$0xff]
    %v646 = vld [vmem:[%s3 + $0x190] sm:$0xff]
    %v647 = vld [vmem:[%s3 + $0x198] sm:$0xff]
    %v648 = vld [vmem:[%s3 + $0x1a0] sm:$0xff]
    %v649 = vld [vmem:[%s3 + $0x1a8] sm:$0xff]
    %v650 = vld [vmem:[%s3 + $0x1b0] sm:$0xff]
    %v651 = vld [vmem:[%s3 + $0x1b8] sm:$0xff]
    %v652 = vld [vmem:[%s3 + $0x1c0] sm:$0xff]
    %v653 = vld [vmem:[%s3 + $0x1c8] sm:$0xff]
    %v654 = vld [vmem:[%s3 + $0x1d0] sm:$0xff]
    %v655 = vld [vmem:[%s3 + $0x1d8] sm:$0xff]
    %v656 = vld [vmem:[%s3 + $0x1e0] sm:$0xff]
    %v657 = vld [vmem:[%s3 + $0x1e8] sm:$0xff]
    %v658 = vld [vmem:[%s3 + $0x1f0] sm:$0xff]
    %v659 = vld [vmem:[%s3 + $0x1f8] sm:$0xff]
    %v660 = vld [vmem:[%s3 + $0x200] sm:$0xff]
    %v661 = vld [vmem:[%s3 + $0x208] sm:$0xff]
    %v662 = vld [vmem:[%s3 + $0x210] sm:$0xff]
    %v663 = vld [vmem:[%s3 + $0x218] sm:$0xff]
    %v664 = vld [vmem:[%s3 + $0x220] sm:$0xff]
    %v665 = vld [vmem:[%s3 + $0x228] sm:$0xff]
    %v666 = vld [vmem:[%s3 + $0x230] sm:$0xff]
    %v667 = vld [vmem:[%s3 + $0x238] sm:$0xff]
    %v668 = vld [vmem:[%s3 + $0x240] sm:$0xff]
    %v669 = vld [vmem:[%s3 + $0x248] sm:$0xff]
    %v670 = vld [vmem:[%s3 + $0x250] sm:$0xff]
    %v671 = vld [vmem:[%s3 + $0x258] sm:$0xff]
    %v672 = vld [vmem:[%s3 + $0x260] sm:$0xff]
    %v673 = vld [vmem:[%s3 + $0x268] sm:$0xff]
    %v674 = vld [vmem:[%s3 + $0x270] sm:$0xff]
    %v675 = vld [vmem:[%s3 + $0x278] sm:$0xff]
    %v676 = vld [vmem:[%s3 + $0x280] sm:$0xff]
    %v677 = vld [vmem:[%s3 + $0x288] sm:$0xff]
    %v678 = vld [vmem:[%s3 + $0x290] sm:$0xff]
    %v679 = vld [vmem:[%s3 + $0x298] sm:$0xff]
    %v680 = vld [vmem:[%s3 + $0x2a0] sm:$0xff]
    %v681 = vld [vmem:[%s3 + $0x2a8] sm:$0xff]
    %v682 = vld [vmem:[%s3 + $0x2b0] sm:$0xff]
    %v683 = vld [vmem:[%s3 + $0x2b8] sm:$0xff]
    %v684 = vld [vmem:[%s3 + $0x2c0] sm:$0xff]
    %v685 = vld [vmem:[%s3 + $0x2c8] sm:$0xff]
    %v686 = vld [vmem:[%s3 + $0x2d0] sm:$0xff]
    %v687 = vld [vmem:[%s3 + $0x2d8] sm:$0xff]
    %v688 = vld [vmem:[%s3 + $0x2e0] sm:$0xff]
    %v689 = vld [vmem:[%s3 + $0x2e8] sm:$0xff]
    %v690 = vld [vmem:[%s3 + $0x2f0] sm:$0xff]
    %v691 = vld [vmem:[%s3 + $0x2f8] sm:$0xff]
    %v692 = vld [vmem:[%s3 + $0x300] sm:$0xff]
    %v693 = vld [vmem:[%s3 + $0x308] sm:$0xff]
    %v694 = vld [vmem:[%s3 + $0x310] sm:$0xff]
    %v695 = vld [vmem:[%s3 + $0x318] sm:$0xff]
    %v696 = vld [vmem:[%s3 + $0x320] sm:$0xff]
    %v697 = vld [vmem:[%s3 + $0x328] sm:$0xff]
    %v698 = vld [vmem:[%s3 + $0x330] sm:$0xff]
    %v699 = vld [vmem:[%s3 + $0x338] sm:$0xff]
    %v700 = vld [vmem:[%s3 + $0x340] sm:$0xff]
    %v701 = vld [vmem:[%s3 + $0x348] sm:$0xff]
    %v702 = vld [vmem:[%s3 + $0x350] sm:$0xff]
    %v703 = vld [vmem:[%s3 + $0x358] sm:$0xff]
    %v704 = vld [vmem:[%s3 + $0x360] sm:$0xff]
    %v705 = vld [vmem:[%s3 + $0x368] sm:$0xff]
    %v706 = vld [vmem:[%s3 + $0x370] sm:$0xff]
    %v707 = vld [vmem:[%s3 + $0x378] sm:$0xff]
    %v708 = vld [vmem:[%s3 + $0x380] sm:$0xff]
    %v709 = vld [vmem:[%s3 + $0x388] sm:$0xff]
    %v710 = vld [vmem:[%s3 + $0x390] sm:$0xff]
    %v711 = vld [vmem:[%s3 + $0x398] sm:$0xff]
    %v712 = vld [vmem:[%s3 + $0x3a0] sm:$0xff]
    %v713 = vld [vmem:[%s3 + $0x3a8] sm:$0xff]
    %v714 = vld [vmem:[%s3 + $0x3b0] sm:$0xff]
    %v715 = vld [vmem:[%s3 + $0x3b8] sm:$0xff]
    %v716 = vld [vmem:[%s3 + $0x3c0] sm:$0xff]
    %v717 = vld [vmem:[%s3 + $0x3c8] sm:$0xff]
    %v718 = vld [vmem:[%s3 + $0x3d0] sm:$0xff]
    %v719 = vld [vmem:[%s3 + $0x3d8] sm:$0xff]
    %v720 = vld [vmem:[%s3 + $0x3e0] sm:$0xff]
    %v721 = vld [vmem:[%s3 + $0x3e8] sm:$0xff]
    %v722 = vld [vmem:[%s3 + $0x3f0] sm:$0xff]
    %v723 = vld [vmem:[%s3 + $0x3f8] sm:$0xff]
    %v724 = vld [vmem:[%s3 + $0x400] sm:$0xff]
    %v725 = vld [vmem:[%s3 + $0x408] sm:$0xff]
    %v726 = vld [vmem:[%s3 + $0x410] sm:$0xff]
    %v727 = vld [vmem:[%s3 + $0x418] sm:$0xff]
    %v728 = vld [vmem:[%s3 + $0x420] sm:$0xff]
    %v729 = vld [vmem:[%s3 + $0x428] sm:$0xff]
    %v730 = vld [vmem:[%s3 + $0x430] sm:$0xff]
    %v731 = vld [vmem:[%s3 + $0x438] sm:$0xff]
    %v732 = vld [vmem:[%s3 + $0x440] sm:$0xff]
    %v733 = vld [vmem:[%s3 + $0x448] sm:$0xff]
    %v734 = vld [vmem:[%s3 + $0x450] sm:$0xff]
    %v735 = vld [vmem:[%s3 + $0x458] sm:$0xff]
    %v736 = vld [vmem:[%s3 + $0x460] sm:$0xff]
    %v737 = vld [vmem:[%s3 + $0x468] sm:$0xff]
    %v738 = vld [vmem:[%s3 + $0x470] sm:$0xff]
    %v739 = vld [vmem:[%s3 + $0x478] sm:$0xff]
    %v740 = vld [vmem:[%s3 + $0x480] sm:$0xff]
    %v741 = vld [vmem:[%s3 + $0x488] sm:$0xff]
    %v742 = vld [vmem:[%s3 + $0x490] sm:$0xff]
    %v743 = vld [vmem:[%s3 + $0x498] sm:$0xff]
    %v744 = vld [vmem:[%s3 + $0x4a0] sm:$0xff]
    %v745 = vld [vmem:[%s3 + $0x4a8] sm:$0xff]
    %v746 = vld [vmem:[%s3 + $0x4b0] sm:$0xff]
    %v747 = vld [vmem:[%s3 + $0x4b8] sm:$0xff]
    %v748 = vld [vmem:[%s3 + $0x4c0] sm:$0xff]
    %v749 = vld [vmem:[%s3 + $0x4c8] sm:$0xff]
    %v750 = vld [vmem:[%s3 + $0x4d0] sm:$0xff]
    %v751 = vld [vmem:[%s3 + $0x4d8] sm:$0xff]
    %v752 = vld [vmem:[%s3 + $0x4e0] sm:$0xff]
    %v753 = vld [vmem:[%s3 + $0x4e8] sm:$0xff]
    %v754 = vld [vmem:[%s3 + $0x4f0] sm:$0xff]
    %v755 = vld [vmem:[%s3 + $0x4f8] sm:$0xff]
    %v756 = vld [vmem:[%s3 + $0x500] sm:$0xff]
    %v757 = vld [vmem:[%s3 + $0x508] sm:$0xff]
    %v758 = vld [vmem:[%s3 + $0x510] sm:$0xff]
    %v759 = vld [vmem:[%s3 + $0x518] sm:$0xff]
    %v760 = vld [vmem:[%s3 + $0x520] sm:$0xff]
    %v761 = vld [vmem:[%s3 + $0x528] sm:$0xff]
    %v762 = vld [vmem:[%s3 + $0x530] sm:$0xff]
    %v763 = vld [vmem:[%s3 + $0x538] sm:$0xff]
    %v764 = vld [vmem:[%s3 + $0x540] sm:$0xff]
    %v765 = vld [vmem:[%s3 + $0x548] sm:$0xff]
    %v766 = vld [vmem:[%s3 + $0x550] sm:$0xff]
    %v767 = vld [vmem:[%s3 + $0x558] sm:$0xff]
    %v768 = vld [vmem:[%s3 + $0x560] sm:$0xff]
    %v769 = vld [vmem:[%s3 + $0x568] sm:$0xff]
    %v770 = vld [vmem:[%s3 + $0x570] sm:$0xff]
    %v771 = vld [vmem:[%s3 + $0x578] sm:$0xff]
    %v772 = vld [vmem:[%s3 + $0x580] sm:$0xff]
    %v773 = vld [vmem:[%s3 + $0x588] sm:$0xff]
    %v774 = vld [vmem:[%s3 + $0x590] sm:$0xff]
    %v775 = vld [vmem:[%s3 + $0x598] sm:$0xff]
    %v776 = vld [vmem:[%s3 + $0x5a0] sm:$0xff]
    %v777 = vld [vmem:[%s3 + $0x5a8] sm:$0xff]
    %v778 = vld [vmem:[%s3 + $0x5b0] sm:$0xff]
    %v779 = vld [vmem:[%s3 + $0x5b8] sm:$0xff]
    %v780 = vld [vmem:[%s3 + $0x5c0] sm:$0xff]
    %v781 = vld [vmem:[%s3 + $0x5c8] sm:$0xff]
    %v782 = vld [vmem:[%s3 + $0x5d0] sm:$0xff]
    %v783 = vld [vmem:[%s3 + $0x5d8] sm:$0xff]
    %v784 = vld [vmem:[%s3 + $0x5e0] sm:$0xff]
    %v785 = vld [vmem:[%s3 + $0x5e8] sm:$0xff]
    %v786 = vld [vmem:[%s3 + $0x5f0] sm:$0xff]
    %v787 = vld [vmem:[%s3 + $0x5f8] sm:$0xff]
    %v788 = vld [vmem:[%s3 + $0x600] sm:$0xff]
    %v789 = vld [vmem:[%s3 + $0x608] sm:$0xff]
    %v790 = vld [vmem:[%s3 + $0x610] sm:$0xff]
    %v791 = vld [vmem:[%s3 + $0x618] sm:$0xff]
    %v792 = vld [vmem:[%s4] sm:$0x3]
    %v794 = vlaneseq
    %v795 = vshrl.u32 %v794, 7
    %v796 = vsub.s32 0, %v795
    %v797 = vrot.slane %v792, %v796
    %v798 = vlaneseq
    %v799 = vshrl.u32 %v798, 7
    %v800 = vsub.s32 1, %v799
    %v801 = vrot.slane %v792, %v800
    %vm804 = vcmask 130048
    %v806 = vsel %vm804, %v595, 0
    %808 = vmatprep.subr.mxu0 %v597
    %809 = vmatpush1.msra.mxu0 %v596
    %810 = vmatprep.subr.mxu0 %v599
    %811 = vmatpush1.msra.mxu0 %v598
    %812 = vmatprep.subr.mxu0 %v601
    %813 = vmatpush1.msra.mxu0 %v600
    %814 = vmatprep.subr.mxu0 %v603
    %815 = vmatpush1.msra.mxu0 %v602
    %816 = vmatprep.subr.mxu0 %v605
    %817 = vmatpush1.msra.mxu0 %v604
    %818 = vmatprep.subr.mxu0 %v607
    %819 = vmatpush1.msra.mxu0 %v606
    %820 = vmatprep.subr.mxu0 %v609
    %821 = vmatpush1.msra.mxu0 %v608
    %822 = vmatprep.subr.mxu0 %v611
    %823 = vmatpush1.msra.mxu0 %v610
    %824 = vmatprep.subr.mxu0 %v613
    %825 = vmatpush1.msra.mxu0 %v612
    %826 = vmatprep.subr.mxu0 %v615
    %827 = vmatpush1.msra.mxu0 %v614
    %828 = vmatprep.subr.mxu0 %v617
    %829 = vmatpush1.msra.mxu0 %v616
    %830 = vmatprep.subr.mxu0 %v619
    %831 = vmatpush1.msra.mxu0 %v618
    %832 = vmatprep.subr.mxu0 %v621
    %833 = vmatpush1.msra.mxu0 %v620
    %834 = vmatprep.subr.mxu0 %v623
    %835 = vmatpush1.msra.mxu0 %v622
    %836 = vmatprep.subr.mxu0 %v625
    %837 = vmatpush1.msra.mxu0 %v624
    %838 = vmatprep.subr.mxu0 %v627
    %839 = vmatpush1.msra.mxu0 %v626
    %840 = vmatprep.subr.mxu0 %v629
    %841 = vmatpush1.msra.mxu0 %v628
    %842 = vmatprep.subr.mxu0 %v631
    %843 = vmatpush1.msra.mxu0 %v630
    %844 = vmatprep.subr.mxu0 %v633
    %845 = vmatpush1.msra.mxu0 %v632
    %846 = vmatprep.subr.mxu0 %v635
    %847 = vmatpush1.msra.mxu0 %v634
    %848 = vmatprep.subr.mxu0 %v637
    %849 = vmatpush1.msra.mxu0 %v636
    %850 = vmatprep.subr.mxu0 %v639
    %851 = vmatpush1.msra.mxu0 %v638
    %852 = vmatprep.subr.mxu0 %v641
    %853 = vmatpush1.msra.mxu0 %v640
    %854 = vmatprep.subr.mxu0 %v643
    %855 = vmatpush1.msra.mxu0 %v642
    %856 = vmatprep.subr.mxu0 %v645
    %857 = vmatpush1.msra.mxu0 %v644
    %858 = vmatprep.subr.mxu0 %v647
    %859 = vmatpush1.msra.mxu0 %v646
    %860 = vmatprep.subr.mxu0 %v649
    %861 = vmatpush1.msra.mxu0 %v648
    %862 = vmatprep.subr.mxu0 %v651
    %863 = vmatpush1.msra.mxu0 %v650
    %864 = vmatprep.subr.mxu0 %v653
    %865 = vmatpush1.msra.mxu0 %v652
    %866 = vmatprep.subr.mxu0 %v655
    %867 = vmatpush1.msra.mxu0 %v654
    %868 = vmatprep.subr.mxu0 %v657
    %869 = vmatpush1.msra.mxu0 %v656
    %870 = vmatprep.subr.mxu0 %v659
    %871 = vmatpush1.msra.mxu0 %v658
    %872 = vmatprep.mubr.f32.mxu0 %v590
    %873 = vmatmul.mubr.f32.gmra.mrb[0].mxu0 %v589
    %v874 = vpop.f32.mrb[0].mxu0
    %v875 = vadd.f32 %v797, %v874
    %v876 = vpop.f32.mrb[0].mxu0
    %v877 = vadd.f32 %v801, %v876
    %878 = vdwg.mxu0
    %879 = vmatprep.subr.mxu0 %v661
    %880 = vmatpush1.msra.mxu0 %v660
    %881 = vmatprep.subr.mxu0 %v663
    %882 = vmatpush1.msra.mxu0 %v662
    %883 = vmatprep.subr.mxu0 %v665
    %884 = vmatpush1.msra.mxu0 %v664
    %885 = vmatprep.subr.mxu0 %v667
    %886 = vmatpush1.msra.mxu0 %v666
    %887 = vmatprep.subr.mxu0 %v669
    %888 = vmatpush1.msra.mxu0 %v668
    %889 = vmatprep.subr.mxu0 %v671
    %890 = vmatpush1.msra.mxu0 %v670
    %891 = vmatprep.subr.mxu0 %v673
    %892 = vmatpush1.msra.mxu0 %v672
    %893 = vmatprep.subr.mxu0 %v675
    %894 = vmatpush1.msra.mxu0 %v674
    %895 = vmatprep.subr.mxu0 %v677
    %896 = vmatpush1.msra.mxu0 %v676
    %897 = vmatprep.subr.mxu0 %v679
    %898 = vmatpush1.msra.mxu0 %v678
    %899 = vmatprep.subr.mxu0 %v681
    %900 = vmatpush1.msra.mxu0 %v680
    %901 = vmatprep.subr.mxu0 %v683
    %902 = vmatpush1.msra.mxu0 %v682
    %903 = vmatprep.subr.mxu0 %v685
    %904 = vmatpush1.msra.mxu0 %v684
    %905 = vmatprep.subr.mxu0 %v687
    %906 = vmatpush1.msra.mxu0 %v686
    %907 = vmatprep.subr.mxu0 %v689
    %908 = vmatpush1.msra.mxu0 %v688
    %909 = vmatprep.subr.mxu0 %v691
    %910 = vmatpush1.msra.mxu0 %v690
    %911 = vmatprep.subr.mxu0 %v693
    %912 = vmatpush1.msra.mxu0 %v692
    %913 = vmatprep.subr.mxu0 %v695
    %914 = vmatpush1.msra.mxu0 %v694
    %915 = vmatprep.subr.mxu0 %v697
    %916 = vmatpush1.msra.mxu0 %v696
    %917 = vmatprep.subr.mxu0 %v699
    %918 = vmatpush1.msra.mxu0 %v698
    %919 = vmatprep.subr.mxu0 %v701
    %920 = vmatpush1.msra.mxu0 %v700
    %921 = vmatprep.subr.mxu0 %v703
    %922 = vmatpush1.msra.mxu0 %v702
    %923 = vmatprep.subr.mxu0 %v705
    %924 = vmatpush1.msra.mxu0 %v704
    %925 = vmatprep.subr.mxu0 %v707
    %926 = vmatpush1.msra.mxu0 %v706
    %927 = vmatprep.subr.mxu0 %v709
    %928 = vmatpush1.msra.mxu0 %v708
    %929 = vmatprep.subr.mxu0 %v711
    %930 = vmatpush1.msra.mxu0 %v710
    %931 = vmatprep.subr.mxu0 %v713
    %932 = vmatpush1.msra.mxu0 %v712
    %933 = vmatprep.subr.mxu0 %v715
    %934 = vmatpush1.msra.mxu0 %v714
    %935 = vmatprep.subr.mxu0 %v717
    %936 = vmatpush1.msra.mxu0 %v716
    %937 = vmatprep.subr.mxu0 %v719
    %938 = vmatpush1.msra.mxu0 %v718
    %939 = vmatprep.subr.mxu0 %v721
    %940 = vmatpush1.msra.mxu0 %v720
    %941 = vmatprep.subr.mxu0 %v723
    %942 = vmatpush1.msra.mxu0 %v722
    %943 = vmatprep.mubr.f32.mxu0 %v592
    %944 = vmatmul.mubr.f32.gmra.mrb[0].mxu0 %v591
    %v945 = vpop.f32.mrb[0].mxu0
    %v946 = vadd.f32 %v875, %v945
    %v947 = vpop.f32.mrb[0].mxu0
    %v948 = vadd.f32 %v877, %v947
    %949 = vdwg.mxu0
    %950 = vmatprep.subr.mxu0 %v725
    %951 = vmatpush1.msra.mxu0 %v724
    %952 = vmatprep.subr.mxu0 %v727
    %953 = vmatpush1.msra.mxu0 %v726
    %954 = vmatprep.subr.mxu0 %v729
    %955 = vmatpush1.msra.mxu0 %v728
    %956 = vmatprep.subr.mxu0 %v731
    %957 = vmatpush1.msra.mxu0 %v730
    %958 = vmatprep.subr.mxu0 %v733
    %959 = vmatpush1.msra.mxu0 %v732
    %960 = vmatprep.subr.mxu0 %v735
    %961 = vmatpush1.msra.mxu0 %v734
    %962 = vmatprep.subr.mxu0 %v737
    %963 = vmatpush1.msra.mxu0 %v736
    %964 = vmatprep.subr.mxu0 %v739
    %965 = vmatpush1.msra.mxu0 %v738
    %966 = vmatprep.subr.mxu0 %v741
    %967 = vmatpush1.msra.mxu0 %v740
    %968 = vmatprep.subr.mxu0 %v743
    %969 = vmatpush1.msra.mxu0 %v742
    %970 = vmatprep.subr.mxu0 %v745
    %971 = vmatpush1.msra.mxu0 %v744
    %972 = vmatprep.subr.mxu0 %v747
    %973 = vmatpush1.msra.mxu0 %v746
    %974 = vmatprep.subr.mxu0 %v749
    %975 = vmatpush1.msra.mxu0 %v748
    %976 = vmatprep.subr.mxu0 %v751
    %977 = vmatpush1.msra.mxu0 %v750
    %978 = vmatprep.subr.mxu0 %v753
    %979 = vmatpush1.msra.mxu0 %v752
    %980 = vmatprep.subr.mxu0 %v755
    %981 = vmatpush1.msra.mxu0 %v754
    %982 = vmatprep.subr.mxu0 %v757
    %983 = vmatpush1.msra.mxu0 %v756
    %984 = vmatprep.subr.mxu0 %v759
    %985 = vmatpush1.msra.mxu0 %v758
    %986 = vmatprep.subr.mxu0 %v761
    %987 = vmatpush1.msra.mxu0 %v760
    %988 = vmatprep.subr.mxu0 %v763
    %989 = vmatpush1.msra.mxu0 %v762
    %990 = vmatprep.subr.mxu0 %v765
    %991 = vmatpush1.msra.mxu0 %v764
    %992 = vmatprep.subr.mxu0 %v767
    %993 = vmatpush1.msra.mxu0 %v766
    %994 = vmatprep.subr.mxu0 %v769
    %995 = vmatpush1.msra.mxu0 %v768
    %996 = vmatprep.subr.mxu0 %v771
    %997 = vmatpush1.msra.mxu0 %v770
    %998 = vmatprep.subr.mxu0 %v773
    %999 = vmatpush1.msra.mxu0 %v772
    %1000 = vmatprep.subr.mxu0 %v775
    %1001 = vmatpush1.msra.mxu0 %v774
    %1002 = vmatprep.subr.mxu0 %v777
    %1003 = vmatpush1.msra.mxu0 %v776
    %1004 = vmatprep.subr.mxu0 %v779
    %1005 = vmatpush1.msra.mxu0 %v778
    %1006 = vmatprep.subr.mxu0 %v781
    %1007 = vmatpush1.msra.mxu0 %v780
    %1008 = vmatprep.subr.mxu0 %v783
    %1009 = vmatpush1.msra.mxu0 %v782
    %1010 = vmatprep.subr.mxu0 %v785
    %1011 = vmatpush1.msra.mxu0 %v784
    %1012 = vmatprep.subr.mxu0 %v787
    %1013 = vmatpush1.msra.mxu0 %v786
    %1014 = vmatprep.mubr.f32.mxu0 %v594
    %1015 = vmatmul.mubr.f32.gmra.mrb[0].mxu0 %v593
    %v1016 = vpop.f32.mrb[0].mxu0
    %v1017 = vadd.f32 %v946, %v1016
    %v1018 = vpop.f32.mrb[0].mxu0
    %v1019 = vadd.f32 %v948, %v1018
    %1020 = vdwg.mxu0
    %1021 = vmatprep.subr.mxu0 %v789
    %1022 = vmatpush1.msra.mxu0 %v788
    %1023 = vmatprep.subr.mxu0 %v791
    %1024 = vmatpush1.msra.mxu0 %v790
    %1025 = vmatprep.subr.mxu0 0.0
    %1026 = vmatpush1.msra.mxu0 0.0
    %1027 = vmatprep.subr.mxu0 0.0
    %1028 = vmatpush1.msra.mxu0 0.0
    %1029 = vmatprep.subr.mxu0 0.0
    %1030 = vmatpush1.msra.mxu0 0.0
    %1031 = vmatprep.subr.mxu0 0.0
    %1032 = vmatpush1.msra.mxu0 0.0
    %1033 = vmatprep.subr.mxu0 0.0
    %1034 = vmatpush1.msra.mxu0 0.0
    %1035 = vmatprep.subr.mxu0 0.0
    %1036 = vmatpush1.msra.mxu0 0.0
    %1037 = vmatprep.subr.mxu0 0.0
    %1038 = vmatpush1.msra.mxu0 0.0
    %1039 = vmatprep.subr.mxu0 0.0
    %1040 = vmatpush1.msra.mxu0 0.0
    %1041 = vmatprep.subr.mxu0 0.0
    %1042 = vmatpush1.msra.mxu0 0.0
    %1043 = vmatprep.subr.mxu0 0.0
    %1044 = vmatpush1.msra.mxu0 0.0
    %1045 = vmatprep.subr.mxu0 0.0
    %1046 = vmatpush1.msra.mxu0 0.0
    %1047 = vmatprep.subr.mxu0 0.0
    %1048 = vmatpush1.msra.mxu0 0.0
    %1049 = vmatprep.subr.mxu0 0.0
    %1050 = vmatpush1.msra.mxu0 0.0
    %1051 = vmatprep.subr.mxu0 0.0
    %1052 = vmatpush1.msra.mxu0 0.0
    %1053 = vmatprep.subr.mxu0 0.0
    %1054 = vmatpush1.msra.mxu0 0.0
    %1055 = vmatprep.subr.mxu0 0.0
    %1056 = vmatpush1.msra.mxu0 0.0
    %1057 = vmatprep.subr.mxu0 0.0
    %1058 = vmatpush1.msra.mxu0 0.0
    %1059 = vmatprep.subr.mxu0 0.0
    %1060 = vmatpush1.msra.mxu0 0.0
    %1061 = vmatprep.subr.mxu0 0.0
    %1062 = vmatpush1.msra.mxu0 0.0
    %1063 = vmatprep.subr.mxu0 0.0
    %1064 = vmatpush1.msra.mxu0 0.0
    %1065 = vmatprep.subr.mxu0 0.0
    %1066 = vmatpush1.msra.mxu0 0.0
    %1067 = vmatprep.subr.mxu0 0.0
    %1068 = vmatpush1.msra.mxu0 0.0
    %1069 = vmatprep.subr.mxu0 0.0
    %1070 = vmatpush1.msra.mxu0 0.0
    %1071 = vmatprep.subr.mxu0 0.0
    %1072 = vmatpush1.msra.mxu0 0.0
    %1073 = vmatprep.subr.mxu0 0.0
    %1074 = vmatpush1.msra.mxu0 0.0
    %1075 = vmatprep.subr.mxu0 0.0
    %1076 = vmatpush1.msra.mxu0 0.0
    %1077 = vmatprep.subr.mxu0 0.0
    %1078 = vmatpush1.msra.mxu0 0.0
    %1079 = vmatprep.subr.mxu0 0.0
    %1080 = vmatpush1.msra.mxu0 0.0
    %1081 = vmatprep.subr.mxu0 0.0
    %1082 = vmatpush1.msra.mxu0 0.0
    %1083 = vmatprep.subr.mxu0 0.0
    %1084 = vmatpush1.msra.mxu0 0.0
    %1085 = vmatprep.mubr.f32.mxu0 0.0
    %1086 = vmatmul.mubr.f32.gmra.mrb[0].mxu0 %v806
    %v1087 = vpop.f32.mrb[0].mxu0
    %v1088 = vadd.f32 %v1017, %v1087
    %v1089 = vpop.f32.mrb[0].mxu0
    %v1090 = vadd.f32 %v1019, %v1089
    %1091 = vdwg.mxu0
    %v1092 = vmax.f32 %v1088, 0.0
    %v1093 = vmax.f32 %v1090, 0.0
    %v1094 = vld [vmem:[%s5] sm:$0xff]
    %v1095 = vld [vmem:[%s5 + $0x8] sm:$0xff]
    %v1096 = vld [vmem:[%s5 + $0x10] sm:$0xff]
    %v1097 = vld [vmem:[%s5 + $0x18] sm:$0xff]
    %v1098 = vld [vmem:[%s5 + $0x20] sm:$0xff]
    %v1099 = vld [vmem:[%s5 + $0x28] sm:$0xff]
    %v1100 = vld [vmem:[%s5 + $0x30] sm:$0xff]
    %v1101 = vld [vmem:[%s5 + $0x38] sm:$0xff]
    %v1102 = vld [vmem:[%s5 + $0x40] sm:$0xff]
    %v1103 = vld [vmem:[%s5 + $0x48] sm:$0xff]
    %v1104 = vld [vmem:[%s5 + $0x50] sm:$0xff]
    %v1105 = vld [vmem:[%s5 + $0x58] sm:$0xff]
    %v1106 = vld [vmem:[%s5 + $0x60] sm:$0xff]
    %v1107 = vld [vmem:[%s5 + $0x68] sm:$0xff]
    %v1108 = vld [vmem:[%s5 + $0x70] sm:$0xff]
    %v1109 = vld [vmem:[%s5 + $0x78] sm:$0xff]
    %v1110 = vld [vmem:[%s5 + $0x80] sm:$0xff]
    %v1111 = vld [vmem:[%s5 + $0x88] sm:$0xff]
    %v1112 = vld [vmem:[%s6] sm:$0x1]
    %v1114 = vlaneseq
    %v1115 = vshrl.u32 %v1114, 7
    %v1116 = vsub.s32 0, %v1115
    %v1117 = vrot.slane %v1112, %v1116
    %v1120 = vsel %vm804, %v1093, 0
    %1122 = vmatprep.subr.mxu0 0.0
    %1123 = vmatpush1.msra.mxu0 %v1094
    %1124 = vmatprep.subr.mxu0 0.0
    %1125 = vmatpush1.msra.mxu0 %v1095
    %1126 = vmatprep.subr.mxu0 0.0
    %1127 = vmatpush1.msra.mxu0 %v1096
    %1128 = vmatprep.subr.mxu0 0.0
    %1129 = vmatpush1.msra.mxu0 %v1097
    %1130 = vmatprep.subr.mxu0 0.0
    %1131 = vmatpush1.msra.mxu0 %v1098
    %1132 = vmatprep.subr.mxu0 0.0
    %1133 = vmatpush1.msra.mxu0 %v1099
    %1134 = vmatprep.subr.mxu0 0.0
    %1135 = vmatpush1.msra.mxu0 %v1100
    %1136 = vmatprep.subr.mxu0 0.0
    %1137 = vmatpush1.msra.mxu0 %v1101
    %1138 = vmatprep.subr.mxu0 0.0
    %1139 = vmatpush1.msra.mxu0 %v1102
    %1140 = vmatprep.subr.mxu0 0.0
    %1141 = vmatpush1.msra.mxu0 %v1103
    %1142 = vmatprep.subr.mxu0 0.0
    %1143 = vmatpush1.msra.mxu0 %v1104
    %1144 = vmatprep.subr.mxu0 0.0
    %1145 = vmatpush1.msra.mxu0 %v1105
    %1146 = vmatprep.subr.mxu0 0.0
    %1147 = vmatpush1.msra.mxu0 %v1106
    %1148 = vmatprep.subr.mxu0 0.0
    %1149 = vmatpush1.msra.mxu0 %v1107
    %1150 = vmatprep.subr.mxu0 0.0
    %1151 = vmatpush1.msra.mxu0 %v1108
    %1152 = vmatprep.subr.mxu0 0.0
    %1153 = vmatpush1.msra.mxu0 %v1109
    %1154 = vmatprep.subr.mxu0 0.0
    %1155 = vmatpush1.msra.mxu0 %v1110
    %1156 = vmatprep.subr.mxu0 0.0
    %1157 = vmatpush1.msra.mxu0 %v1111
    %1158 = vmatprep.subr.mxu0 0.0
    %1159 = vmatpush1.msra.mxu0 0.0
    %1160 = vmatprep.subr.mxu0 0.0
    %1161 = vmatpush1.msra.mxu0 0.0
    %1162 = vmatprep.subr.mxu0 0.0
    %1163 = vmatpush1.msra.mxu0 0.0
    %1164 = vmatprep.subr.mxu0 0.0
    %1165 = vmatpush1.msra.mxu0 0.0
    %1166 = vmatprep.subr.mxu0 0.0
    %1167 = vmatpush1.msra.mxu0 0.0
    %1168 = vmatprep.subr.mxu0 0.0
    %1169 = vmatpush1.msra.mxu0 0.0
    %1170 = vmatprep.subr.mxu0 0.0
    %1171 = vmatpush1.msra.mxu0 0.0
    %1172 = vmatprep.subr.mxu0 0.0
    %1173 = vmatpush1.msra.mxu0 0.0
    %1174 = vmatprep.subr.mxu0 0.0
    %1175 = vmatpush1.msra.mxu0 0.0
    %1176 = vmatprep.subr.mxu0 0.0
    %1177 = vmatpush1.msra.mxu0 0.0
    %1178 = vmatprep.subr.mxu0 0.0
    %1179 = vmatpush1.msra.mxu0 0.0
    %1180 = vmatprep.subr.mxu0 0.0
    %1181 = vmatpush1.msra.mxu0 0.0
    %1182 = vmatprep.subr.mxu0 0.0
    %1183 = vmatpush1.msra.mxu0 0.0
    %1184 = vmatprep.subr.mxu0 0.0
    %1185 = vmatpush1.msra.mxu0 0.0
    %1186 = vmatprep.mubr.f32.mxu0 %v1120
    %1187 = vmatmul.mubr.f32.gmra.mrb[0].mxu0 %v1092
    %v1188 = vpop.f32.mrb[0].mxu0
    %v1189 = vadd.f32 %v1117, %v1188
    %v1190 = vpop.f32.mrb[0].mxu0
    %1191 = vdwg.mxu0
    %v1192 = vmax.f32 %v1189, 0.0
    %v1193 = vld [vmem:[%s7] sm:$0xff]
    %v1194 = vld [vmem:[%s7 + $0x8] sm:$0xff]
    %v1195 = vld [vmem:[%s8] sm:$0x1]
    %v1197 = vlaneseq
    %v1198 = vshrl.u32 %v1197, 7
    %v1199 = vsub.s32 0, %v1198
    %v1200 = vrot.slane %v1195, %v1199
    %v1203 = vsel %vm804, %v1192, 0
    %1205 = vmatprep.subr.mxu0 0.0
    %1206 = vmatpush1.msra.mxu0 %v1193
    %1207 = vmatprep.subr.mxu0 0.0
    %1208 = vmatpush1.msra.mxu0 %v1194
    %1209 = vmatprep.subr.mxu0 0.0
    %1210 = vmatpush1.msra.mxu0 0.0
    %1211 = vmatprep.subr.mxu0 0.0
    %1212 = vmatpush1.msra.mxu0 0.0
    %1213 = vmatprep.subr.mxu0 0.0
    %1214 = vmatpush1.msra.mxu0 0.0
    %1215 = vmatprep.subr.mxu0 0.0
    %1216 = vmatpush1.msra.mxu0 0.0
    %1217 = vmatprep.subr.mxu0 0.0
    %1218 = vmatpush1.msra.mxu0 0.0
    %1219 = vmatprep.subr.mxu0 0.0
    %1220 = vmatpush1.msra.mxu0 0.0
    %1221 = vmatprep.subr.mxu0 0.0
    %1222 = vmatpush1.msra.mxu0 0.0
    %1223 = vmatprep.subr.mxu0 0.0
    %1224 = vmatpush1.msra.mxu0 0.0
    %1225 = vmatprep.subr.mxu0 0.0
    %1226 = vmatpush1.msra.mxu0 0.0
    %1227 = vmatprep.subr.mxu0 0.0
    %1228 = vmatpush1.msra.mxu0 0.0
    %1229 = vmatprep.subr.mxu0 0.0
    %1230 = vmatpush1.msra.mxu0 0.0
    %1231 = vmatprep.subr.mxu0 0.0
    %1232 = vmatpush1.msra.mxu0 0.0
    %1233 = vmatprep.subr.mxu0 0.0
    %1234 = vmatpush1.msra.mxu0 0.0
    %1235 = vmatprep.subr.mxu0 0.0
    %1236 = vmatpush1.msra.mxu0 0.0
    %1237 = vmatprep.subr.mxu0 0.0
    %1238 = vmatpush1.msra.mxu0 0.0
    %1239 = vmatprep.subr.mxu0 0.0
    %1240 = vmatpush1.msra.mxu0 0.0
    %1241 = vmatprep.subr.mxu0 0.0
    %1242 = vmatpush1.msra.mxu0 0.0
    %1243 = vmatprep.subr.mxu0 0.0
    %1244 = vmatpush1.msra.mxu0 0.0
    %1245 = vmatprep.subr.mxu0 0.0
    %1246 = vmatpush1.msra.mxu0 0.0
    %1247 = vmatprep.subr.mxu0 0.0
    %1248 = vmatpush1.msra.mxu0 0.0
    %1249 = vmatprep.subr.mxu0 0.0
    %1250 = vmatpush1.msra.mxu0 0.0
    %1251 = vmatprep.subr.mxu0 0.0
    %1252 = vmatpush1.msra.mxu0 0.0
    %1253 = vmatprep.subr.mxu0 0.0
    %1254 = vmatpush1.msra.mxu0 0.0
    %1255 = vmatprep.subr.mxu0 0.0
    %1256 = vmatpush1.msra.mxu0 0.0
    %1257 = vmatprep.subr.mxu0 0.0
    %1258 = vmatpush1.msra.mxu0 0.0
    %1259 = vmatprep.subr.mxu0 0.0
    %1260 = vmatpush1.msra.mxu0 0.0
    %1261 = vmatprep.subr.mxu0 0.0
    %1262 = vmatpush1.msra.mxu0 0.0
    %1263 = vmatprep.subr.mxu0 0.0
    %1264 = vmatpush1.msra.mxu0 0.0
    %1265 = vmatprep.subr.mxu0 0.0
    %1266 = vmatpush1.msra.mxu0 0.0
    %1267 = vmatprep.subr.mxu0 0.0
    %1268 = vmatpush1.msra.mxu0 0.0
    %1269 = vmatprep.mubr.f32.mxu0 0.0
    %1270 = vmatmul.mubr.f32.gmra.mrb[0].mxu0 %v1203
    %v1271 = vpop.f32.mrb[0].mxu0
    %v1272 = vadd.f32 %v1200, %v1271
    %v1273 = vpop.f32.mrb[0].mxu0
    %1274 = vdwg.mxu0
    %vm1275 = vcmask 74752
    %1276 = vst.msk [vmem:[#allocation2] sm:$0x3] %vm1275, %v1272
    // Predicated region
    $region38: #{pruned_cnn_forward.1} parent=1 // pred_check
      _
    $region39: #{pruned_cnn_forward.1} parent=1 // pred_check_branch
      %1278 = sbr.rel (0) target = $region41
    $region40: #{pruned_cnn_forward.1} parent=1 // pred_region
      %s1280 = ssub.s32 32, 32
      %1281 = vsyncadd [#allocation3], %s1280
      %s1283 = sshll.u32 [#allocation2], 4
      %s1284 = int_to_ptr.vmem [resolvable:$true] %s1283
      %1286 = dma.vmem_to_hbm [thread:$0]  %s1284, 32, %s9, [#allocation3]
    $region41: #{pruned_cnn_forward.1} parent=1 // pred_fallthru
      _
    // Predicated region
    $region42: #{pruned_cnn_forward.1} parent=1 // pred_check
      _
    $region43: #{pruned_cnn_forward.1} parent=1 // pred_check_branch
      %1288 = sbr.rel (0) target = $region45
    $region44: #{pruned_cnn_forward.1} parent=1 // pred_region
      %1289 = dma.done [#allocation3], 32
    $region45: #{pruned_cnn_forward.1} parent=1 // pred_fallthru
      _
    %1290 = vsyncpa [#allocation3], 1

</llo_original>
